<compile_context>
chip_gen: v5e
topology: v5e:2x2
jax: 0.10.0
libtpu: 0.0.40
codegen_flags: <defaults>
</compile_context>

<pallas_src>
import numpy as np
import jax
import jax.numpy as jnp
from jax import lax
from jax.experimental import pallas as pl
from jax.experimental.pallas import tpu as pltpu


_VMEM_LIMIT = 32 * 1024 * 1024          # scoped-VMEM request (safe on v5e/v6e/v7x)
_BLOCK_BYTES_BUDGET = 4 * 1024 * 1024   # target for one input block (x~4 for
                                        # in/out double buffering ~= 16 MiB)


# ----------------------------- host-side helpers (layout glue) ----------------

def _adaptive_pool_matrix(in_size, out_size):
    """[out, in] 1-D averaging matrix reproducing F.adaptive_avg_pool2d windows."""
    m = np.zeros((out_size, in_size), dtype=np.float32)
    for i in range(out_size):
        start = (i * in_size) // out_size
        end = -((-(i + 1) * in_size) // out_size)          # ceil((i+1)*in/out)
        m[i, start:end] = 1.0 / float(end - start)
    return m


def _nearest_matrix(out_size, in_size):
    """[out, in] 1-D one-hot matrix for F.interpolate(mode='nearest')."""
    m = np.zeros((out_size, in_size), dtype=np.float32)
    for i in range(out_size):
        m[i, (i * in_size) // out_size] = 1.0
    return m


def _pick_row_tile(h0, c, w0, bytes_per_elem=4):
    """Row tile over H0 for the conv1x1 + W-pool kernel (always divides H0)."""
    if h0 <= 8:
        return h0
    cands = [t for t in range(8, h0 + 1, 8) if h0 % t == 0]
    if not cands:
        return h0
    best = cands[0]
    for t in cands:
        if c * t * w0 * bytes_per_elem <= _BLOCK_BYTES_BUDGET:
            best = t
    return best


def _pick_channel_tile(c, ni, bytes_per_elem=4):
    """Channel tile for the per-level broadcast-add kernel (always divides C)."""
    if c <= 8:
        return c
    cands = [t for t in range(8, c + 1, 8) if c % t == 0]
    if not cands:
        return c
    best = cands[0]
    for t in cands:
        if t * ni * bytes_per_elem <= _BLOCK_BYTES_BUDGET:
            best = t
    return best


# ----------------------------- Pallas kernels ---------------------------------

def _conv1x1_wpool_kernel(x0_ref, wcom_ref, bcom_ref, poolwt_ref, yw_ref):
    """Per (batch, H0 row-tile): 1x1 conv (+bias) to 2 channels, then the
    W-direction half of the separable adaptive average pool."""
    c = x0_ref.shape[1]
    th0 = x0_ref.shape[2]
    w0 = x0_ref.shape[3]
    x0 = x0_ref[0]                                              # [c, th0, W0]
    # conv-before-pool: only 2 rows flow into the pooling matmuls.
    y = jnp.dot(wcom_ref[...], x0.reshape(c, th0 * w0),
                preferred_element_type=jnp.float32) + bcom_ref[...]   # [2, th0*W0]
    y3 = y.reshape(2, th0, w0)
    yw_ref[0, 0] = jnp.dot(y3[0], poolwt_ref[...],
                           preferred_element_type=jnp.float32)  # [th0, w]
    yw_ref[0, 1] = jnp.dot(y3[1], poolwt_ref[...],
                           preferred_element_type=jnp.float32)


def _relation_map_kernel(yw_ref, poolh_ref, x2p_ref, wen_ref, ben_ref, rel_ref):
    """Per batch: finish the H-direction pool + relu, collapse the rank-1
    'relation' to map * (sum(other)/hw), run the 3x3 conv on inputs[2] as one
    channel-contraction matmul + 9 shifted accumulations, and emit the single
    combined relation map (object_map + class_map)."""
    h = rel_ref.shape[1]
    w = rel_ref.shape[2]
    hw = h * w
    hp, wp = h + 2, w + 2

    # ---- object map (adaptively pooled inputs[0]) ----
    u0 = jnp.dot(poolh_ref[...], yw_ref[0, 0],
                 preferred_element_type=jnp.float32)            # [h, w]
    u1 = jnp.dot(poolh_ref[...], yw_ref[0, 1],
                 preferred_element_type=jnp.float32)
    m1 = jnp.maximum(u0, 0.0)
    m2 = jnp.maximum(u1, 0.0)
    obj = m1 * (jnp.sum(m2) / hw)                               # scalar rescale,
                                                                # no [hw,hw] tensor
    # ---- class map (3x3 conv, padding=1, on inputs[2]) ----
    t = jnp.dot(wen_ref[...], x2p_ref[0],
                preferred_element_type=jnp.float32)             # [18, (h+2)(w+2)]
    t3 = t.reshape(2 * 9, hp, wp)
    acc = jnp.zeros((2, h, w), jnp.float32)
    for k in range(9):                                          # 9 shifted adds
        dy, dx = k // 3, k % 3
        acc = acc + t3[2 * k:2 * k + 2, dy:dy + h, dx:dx + w]
    e = jnp.maximum(acc + ben_ref[...], 0.0)
    cls = e[0] * (jnp.sum(e[1]) / hw)

    # rel map is tiny ([h, w]); sub-128 lanes here cost nothing.
    rel_ref[0] = obj + cls


def _upsample_kernel(rel_ref, selh_ref, selwt_ref, up_ref):
    """Nearest-neighbour resize of the combined relation map via two tiny
    separable one-hot matmuls."""
    tmp = jnp.dot(selh_ref[...], rel_ref[0],
                  preferred_element_type=jnp.float32)           # [Hi, w]
    up_ref[0, 0] = jnp.dot(tmp, selwt_ref[...],
                           preferred_element_type=jnp.float32)  # [Hi, Wi]


def _broadcast_add_kernel(x_ref, up_ref, o_ref):
    """Memory-bound workhorse: out = x + relation_map, broadcast over the
    channel tile."""
    o_ref[...] = x_ref[...] + up_ref[...]


# ----------------------------- wrapper -----------------------------------------

def fpn_relation_forward(inputs, w_com, b_com, w_en, b_en):
    """inputs: tuple of NCHW float32 arrays (num_levels entries).
    w_com: [2, C] (1x1 convs), b_com: [2], w_en: [2, C, 3, 3] (3x3 convs), b_en: [2].
    """
    num_levels = len(inputs)
    x2 = inputs[2]
    b, c, h, w = x2.shape
    h0, w0 = inputs[0].shape[2], inputs[0].shape[3]
    f32 = jnp.float32

    wcom2 = jnp.asarray(w_com, f32).reshape(2, c)
    wen18 = jnp.transpose(jnp.asarray(w_en, f32), (2, 3, 0, 1)).reshape(18, c)
    bcom = jnp.asarray(b_com, f32).reshape(2, 1)
    ben = jnp.asarray(b_en, f32).reshape(2, 1, 1)

    # tiny separable 1-D pooling matrices (KBs, not the kron'd [n0, hw] monster)
    pool_wt = jnp.asarray(_adaptive_pool_matrix(w0, w).T)       # [W0, w]
    pool_h = jnp.asarray(_adaptive_pool_matrix(h0, h))          # [h, H0]

    # --- stage 1: 1x1 conv + W-direction pool on inputs[0], row-tiled over H0 ---
    th0 = _pick_row_tile(h0, c, w0)
    yw = pl.pallas_call(
        _conv1x1_wpool_kernel,
        grid=(b, h0 // th0),
        in_specs=[
            pl.BlockSpec((1, c, th0, w0), lambda i, t: (i, 0, t, 0)),
            pl.BlockSpec((2, c), lambda i, t: (0, 0)),
            pl.BlockSpec((2, 1), lambda i, t: (0, 0)),
            pl.BlockSpec((w0, w), lambda i, t: (0, 0)),
        ],
        out_specs=pl.BlockSpec((1, 2, th0, w), lambda i, t: (i, 0, t, 0)),
        out_shape=jax.ShapeDtypeStruct((b, 2, h0, w), f32),
        compiler_params=pltpu.CompilerParams(
            dimension_semantics=("parallel", "parallel"),
            vmem_limit_bytes=_VMEM_LIMIT),
    )(inputs[0], wcom2, bcom, pool_wt)

    # --- stage 2: finish pooling + relation algebra + 3x3 conv -> combined map ---
    hp, wp = h + 2, w + 2
    x2p_flat = jnp.pad(x2, ((0, 0), (0, 0), (1, 1), (1, 1))).reshape(b, c, hp * wp)
    rel = pl.pallas_call(
        _relation_map_kernel,
        grid=(b,),
        in_specs=[
            pl.BlockSpec((1, 2, h0, w), lambda i: (i, 0, 0, 0)),
            pl.BlockSpec((h, h0), lambda i: (0, 0)),
            pl.BlockSpec((1, c, hp * wp), lambda i: (i, 0, 0)),
            pl.BlockSpec((18, c), lambda i: (0, 0)),
            pl.BlockSpec((2, 1, 1), lambda i: (0, 0, 0)),
        ],
        out_specs=pl.BlockSpec((1, h, w), lambda i: (i, 0, 0)),
        out_shape=jax.ShapeDtypeStruct((b, h, w), f32),
        compiler_params=pltpu.CompilerParams(
            dimension_semantics=("parallel",),
            vmem_limit_bytes=_VMEM_LIMIT),
    )(yw, pool_h, x2p_flat, wen18, ben)

    # --- stage 3 (per level): nearest resize of the single map, broadcast add ---
    outs = []
    for lvl in range(num_levels):
        hi, wi = inputs[lvl].shape[2], inputs[lvl].shape[3]
        sel_h = jnp.asarray(_nearest_matrix(hi, h))             # [Hi, h]
        sel_wt = jnp.asarray(_nearest_matrix(wi, w).T)          # [w, Wi]

        up = pl.pallas_call(
            _upsample_kernel,
            grid=(b,),
            in_specs=[
                pl.BlockSpec((1, h, w), lambda i: (i, 0, 0)),
                pl.BlockSpec((hi, h), lambda i: (0, 0)),
                pl.BlockSpec((w, wi), lambda i: (0, 0)),
            ],
            out_specs=pl.BlockSpec((1, 1, hi, wi), lambda i: (i, 0, 0, 0)),
            out_shape=jax.ShapeDtypeStruct((b, 1, hi, wi), f32),
            compiler_params=pltpu.CompilerParams(
                dimension_semantics=("parallel",),
                vmem_limit_bytes=_VMEM_LIMIT),
        )(rel, sel_h, sel_wt)

        # memory-bound add: channel-tiled blocks in native NCHW, contiguous DMA,
        # b * (C/TC) parallel grid steps, ~<= 20 MiB double-buffered working set.
        tc = _pick_channel_tile(c, hi * wi)
        out = pl.pallas_call(
            _broadcast_add_kernel,
            grid=(b, c // tc),
            in_specs=[
                pl.BlockSpec((1, tc, hi, wi), lambda i, k: (i, k, 0, 0)),
                pl.BlockSpec((1, 1, hi, wi), lambda i, k: (i, 0, 0, 0)),
            ],
            out_specs=pl.BlockSpec((1, tc, hi, wi), lambda i, k: (i, k, 0, 0)),
            out_shape=jax.ShapeDtypeStruct((b, c, hi, wi), f32),
            compiler_params=pltpu.CompilerParams(
                dimension_semantics=("parallel", "parallel"),
                vmem_limit_bytes=_VMEM_LIMIT),
        )(inputs[lvl], up)
        outs.append(out)
    return tuple(outs)


# ----------------------------- pure-JAX reference (for checking) ---------------

def _reference_forward(inputs, w_com, b_com, w_en, b_en):
    # Straight transliteration of the PyTorch forward (keeps the explicit
    # [hw, hw] outer product so it independently checks the algebraic rewrite).
    x2 = inputs[2]
    b, c, h, w = x2.shape
    h0, w0 = inputs[0].shape[2:]
    kh, kw = h0 // h, w0 // w
    pooled = inputs[0].reshape(b, c, h, kh, w, kw).mean(axis=(3, 5))
    m1 = jax.nn.relu(jnp.einsum('bchw,c->bhw', pooled, w_com[0]) + b_com[0]).reshape(b, h * w)
    m2 = jax.nn.relu(jnp.einsum('bchw,c->bhw', pooled, w_com[1]) + b_com[1]).reshape(b, h * w)
    obj = ((m1[:, :, None] * m2[:, None, :]).sum(-1) / (h * w)).reshape(b, 1, h, w)

    def conv3(x, wgt, bias):
        y = lax.conv_general_dilated(x, wgt[None], (1, 1), 'SAME',
                                     dimension_numbers=('NCHW', 'OIHW', 'NCHW'))
        return jax.nn.relu(y + bias)

    c1 = conv3(x2, w_en[0], b_en[0]).reshape(b, h * w)
    c2 = conv3(x2, w_en[1], b_en[1]).reshape(b, h * w)
    cls = ((c1[:, :, None] * c2[:, None, :]).sum(-1) / (h * w)).reshape(b, 1, h, w)

    outs = []
    for x in inputs:
        hi, wi = x.shape[2:]
        uo = jnp.repeat(jnp.repeat(obj, hi // h, axis=2), wi // w, axis=3)
        uc = jnp.repeat(jnp.repeat(cls, hi // h, axis=2), wi // w, axis=3)
        outs.append(x + uo + uc)
    return outs


if __name__ == "__main__":
    key = jax.random.PRNGKey(0)
    ks = jax.random.split(key, 8)
    b, c = 2, 4
    sizes = [(16, 16), (8, 8), (4, 4)]        # num_levels = 3; inputs[2] -> h=w=4
    inputs = tuple(
        jax.random.normal(ks[i], (b, c, hh, ww), dtype=jnp.float32)
        for i, (hh, ww) in enumerate(sizes))

    # deterministic xavier-uniform-ish parameters (ConvModule conv weight + bias)
    cbound = float(np.sqrt(6.0 / (c + 1)))
    ebound = float(np.sqrt(6.0 / (c * 9 + 9)))
    w_com = jax.random.uniform(ks[3], (2, c), jnp.float32, -cbound, cbound)
    w_en = jax.random.uniform(ks[4], (2, c, 3, 3), jnp.float32, -ebound, ebound)
    b_com = jax.random.uniform(ks[5], (2,), jnp.float32, -0.1, 0.1)
    b_en = jax.random.uniform(ks[6], (2,), jnp.float32, -0.1, 0.1)

    outs = fpn_relation_forward(inputs, w_com, b_com, w_en, b_en)
    outs = jax.block_until_ready(outs)

    refs = _reference_forward(inputs, w_com, b_com, w_en, b_en)
    for o, r in zip(outs, refs):
        assert o.shape == r.shape and o.dtype == r.dtype
        # 1e-2 (5x tighter than before) catches any layout/indexing bug while
        # tolerating MXU/XLA matmul-precision-mode rounding differences.
        np.testing.assert_allclose(np.asarray(o), np.asarray(r),
                                   rtol=1e-2, atol=1e-2)
    print("KERNEL_OK")
</pallas_src>

<mosaic_0001>
module attributes {stable_mosaic.version = 11 : i64} {
  func.func @_conv1x1_wpool_kernel(%arg0: i32, %arg1: i32, %arg2: memref<1x4x16x16xf32, #tpu.memory_space<vmem>>, %arg3: memref<2x4xf32, #tpu.memory_space<vmem>>, %arg4: memref<2x1xf32, #tpu.memory_space<vmem>>, %arg5: memref<16x4xf32, #tpu.memory_space<vmem>>, %arg6: memref<1x2x16x4xf32, #tpu.memory_space<vmem>>) attributes {dimension_semantics = [#tpu.dimension_semantics<parallel>, #tpu.dimension_semantics<parallel>], iteration_bounds = array<i64: 2, 1>, scalar_prefetch = 0 : i64, scratch_operands = 0 : i64, tpu.core_type = #tpu.core_type<tc>, window_params = [{transform_indices = @transform_0, window_bounds = array<i64: 1, 4, 16, 16>}, {pipeline_mode = #tpu.pipeline_mode<synchronous>, transform_indices = @transform_1, window_bounds = array<i64: 2, 4>}, {pipeline_mode = #tpu.pipeline_mode<synchronous>, transform_indices = @transform_2, window_bounds = array<i64: 2, 1>}, {pipeline_mode = #tpu.pipeline_mode<synchronous>, transform_indices = @transform_3, window_bounds = array<i64: 16, 4>}, {transform_indices = @transform_4, window_bounds = array<i64: 1, 2, 16, 4>}]} {
    %c0 = arith.constant 0 : index
    %c0_0 = arith.constant 0 : index
    %c0_1 = arith.constant 0 : index
    %c0_2 = arith.constant 0 : index
    %0 = vector.load %arg2[%c0, %c0_0, %c0_1, %c0_2] : memref<1x4x16x16xf32, #tpu.memory_space<vmem>>, vector<1x4x16x16xf32>
    %1 = vector.shape_cast %0 : vector<1x4x16x16xf32> to vector<4x16x16xf32>
    %c0_3 = arith.constant 0 : index
    %c0_4 = arith.constant 0 : index
    %2 = vector.load %arg3[%c0_3, %c0_4] : memref<2x4xf32, #tpu.memory_space<vmem>>, vector<2x4xf32>
    %3 = vector.shape_cast %1 : vector<4x16x16xf32> to vector<4x256xf32>
    %cst = arith.constant dense<0.000000e+00> : vector<2x256xf32>
    %4 = tpu.matmul %2, %3, %cst {dimension_numbers = #tpu.dot_dimension_numbers<[1], [0], [0], [1], [0, 0, 1, 1], [], []>} : vector<2x4xf32>, vector<4x256xf32>, vector<2x256xf32> -> vector<2x256xf32>
    %c0_5 = arith.constant 0 : index
    %c0_6 = arith.constant 0 : index
    %5 = vector.load %arg4[%c0_5, %c0_6] : memref<2x1xf32, #tpu.memory_space<vmem>>, vector<2x1xf32>
    %6 = vector.broadcast %5 : vector<2x1xf32> to vector<2x256xf32>
    %7 = arith.addf %4, %6 : vector<2x256xf32>
    %8 = vector.shape_cast %7 : vector<2x256xf32> to vector<2x16x16xf32>
    %9 = vector.extract_strided_slice %8 {offsets = [0, 0, 0], sizes = [1, 16, 16], strides = [1, 1, 1]} : vector<2x16x16xf32> to vector<1x16x16xf32>
    %10 = vector.shape_cast %9 : vector<1x16x16xf32> to vector<16x16xf32>
    %c0_7 = arith.constant 0 : index
    %c0_8 = arith.constant 0 : index
    %11 = vector.load %arg5[%c0_7, %c0_8] : memref<16x4xf32, #tpu.memory_space<vmem>>, vector<16x4xf32>
    %cst_9 = arith.constant dense<0.000000e+00> : vector<16x4xf32>
    %12 = tpu.matmul %10, %11, %cst_9 {dimension_numbers = #tpu.dot_dimension_numbers<[1], [0], [0], [1], [0, 0, 1, 1], [], []>} : vector<16x16xf32>, vector<16x4xf32>, vector<16x4xf32> -> vector<16x4xf32>
    %c0_10 = arith.constant 0 : index
    %c0_11 = arith.constant 0 : index
    %c0_12 = arith.constant 0 : index
    %c0_13 = arith.constant 0 : index
    %13 = vector.load %arg6[%c0_10, %c0_11, %c0_12, %c0_13] : memref<1x2x16x4xf32, #tpu.memory_space<vmem>>, vector<1x1x16x4xf32>
    %14 = vector.shape_cast %13 : vector<1x1x16x4xf32> to vector<16x4xf32>
    %15 = vector.shape_cast %12 : vector<16x4xf32> to vector<1x1x16x4xf32>
    tpu.vector_store %arg6[%c0_10, %c0_11, %c0_12, %c0_13], %15 {strides = array<i32>} : memref<1x2x16x4xf32, #tpu.memory_space<vmem>>, vector<1x1x16x4xf32>,
    %16 = vector.extract_strided_slice %8 {offsets = [1, 0, 0], sizes = [1, 16, 16], strides = [1, 1, 1]} : vector<2x16x16xf32> to vector<1x16x16xf32>
    %17 = vector.shape_cast %16 : vector<1x16x16xf32> to vector<16x16xf32>
    %c0_14 = arith.constant 0 : index
    %c0_15 = arith.constant 0 : index
    %18 = vector.load %arg5[%c0_14, %c0_15] : memref<16x4xf32, #tpu.memory_space<vmem>>, vector<16x4xf32>
    %cst_16 = arith.constant dense<0.000000e+00> : vector<16x4xf32>
    %19 = tpu.matmul %17, %18, %cst_16 {dimension_numbers = #tpu.dot_dimension_numbers<[1], [0], [0], [1], [0, 0, 1, 1], [], []>} : vector<16x16xf32>, vector<16x4xf32>, vector<16x4xf32> -> vector<16x4xf32>
    %c0_17 = arith.constant 0 : index
    %c1 = arith.constant 1 : index
    %c0_18 = arith.constant 0 : index
    %c0_19 = arith.constant 0 : index
    %20 = vector.load %arg6[%c0_17, %c1, %c0_18, %c0_19] : memref<1x2x16x4xf32, #tpu.memory_space<vmem>>, vector<1x1x16x4xf32>
    %21 = vector.shape_cast %20 : vector<1x1x16x4xf32> to vector<16x4xf32>
    %22 = vector.shape_cast %19 : vector<16x4xf32> to vector<1x1x16x4xf32>
    tpu.vector_store %arg6[%c0_17, %c1, %c0_18, %c0_19], %22 {strides = array<i32>} : memref<1x2x16x4xf32, #tpu.memory_space<vmem>>, vector<1x1x16x4xf32>,
    return
  }
  func.func @transform_0(%arg0: i32, %arg1: i32) -> (i32, i32, i32, i32) {
    %c0_i32 = arith.constant 0 : i32
    %c0_i32_0 = arith.constant 0 : i32
    %c0_i32_1 = arith.constant 0 : i32
    return %arg0, %c0_i32, %arg1, %c0_i32_0 : i32, i32, i32, i32
  }
  func.func @transform_1(%arg0: i32, %arg1: i32) -> (i32, i32) {
    %c0_i32 = arith.constant 0 : i32
    %c0_i32_0 = arith.constant 0 : i32
    %c0_i32_1 = arith.constant 0 : i32
    return %c0_i32, %c0_i32_0 : i32, i32
  }
  func.func @transform_2(%arg0: i32, %arg1: i32) -> (i32, i32) {
    %c0_i32 = arith.constant 0 : i32
    %c0_i32_0 = arith.constant 0 : i32
    %c0_i32_1 = arith.constant 0 : i32
    return %c0_i32, %c0_i32_0 : i32, i32
  }
  func.func @transform_3(%arg0: i32, %arg1: i32) -> (i32, i32) {
    %c0_i32 = arith.constant 0 : i32
    %c0_i32_0 = arith.constant 0 : i32
    %c0_i32_1 = arith.constant 0 : i32
    return %c0_i32, %c0_i32_0 : i32, i32
  }
  func.func @transform_4(%arg0: i32, %arg1: i32) -> (i32, i32, i32, i32) {
    %c0_i32 = arith.constant 0 : i32
    %c0_i32_0 = arith.constant 0 : i32
    %c0_i32_1 = arith.constant 0 : i32
    return %arg0, %c0_i32, %arg1, %c0_i32_0 : i32, i32, i32, i32
  }
}

</mosaic_0001>

<llo_original>
// kernel: tpu_custom_call.1
$region0: #{tpu_custom_call.1}
  #allocation0 [shape = 'u32[]', space=smem, size = 0x4, offset = 0x4, fixed_abs, tag = 'smem constant byte address 0x4 - core index']
  #allocation1 [shape = 'u32[72,128]{1,0:T(1,128)}', space=vmem, size = 0x9000, scoped, tag = 'internal scratch']
  %s0 = inlined_call_operand.hbm [shape: f32[2,4,16,16], index: 0, kind: input, shape index: {}]
  %s1 = inlined_call_operand.vmem [shape: f32[2,4], index: 1, kind: input, shape index: {}]
  %s2 = inlined_call_operand.vmem [shape: f32[2,1], index: 2, kind: input, shape index: {}]
  %s3 = inlined_call_operand.vmem [shape: f32[16,4], index: 3, kind: input, shape index: {}]
  %s4 = inlined_call_operand.vmem [shape: f32[2,2,16,4], index: 4, kind: output, shape index: {}]
  %s5 = sld [smem:[#allocation0]]
  $region53: #{tpu_custom_call.1} parent=0
    _
  %s7 = ssub.s32 1, %s5
  %s8 = scalar_select 0, %s7, %s5
  $region1: #{tpu_custom_call.1} parent=0
    #allocation2 [shape = 'u8[65536]{0}', space=vmem, size = 0x10000, scoped, tag = 'input window, operand 0']
    #allocation3 [shape = 's32[2]{0}', space=sflag, size = 0x8, scoped, tag = 'scoped memory for tpu_custom_call.1']
    %9 = vsyncpa [#allocation3], 0
    %s10 = scalar_lea.sflag [#allocation3], 1
    %11 = vsyncpa %s10, 0
    loop: start=0, step=1, limit=4
    $region2: #{tpu_custom_call.1} parent=1 // loop_pre_header
      _
    $region3: #{tpu_custom_call.1} parent=1 // loop_header
      %s13 = sphi 0, %s17
      %p14 = scmp.ge.s32.totalorder %s13, 4
      %s20 = sphi 0, %s32
      %s21 = sphi 0, %s28
      %s22 = sphi 0, %s20
      %s23 = sphi 0, %s21
      %s24 = sphi 0, %s22
      %s25 = sphi 0, %s23
      %s37 = sphi 0, %s39
      %s40 = sphi 0, %s37
      %s41 = sphi 0, %s40
      %s57 = sphi 0, %s41
      %s61 = sphi 0, %s61
      %s63 = sphi 0, %s61
      %s64 = sphi 0, %s63
      %s78 = sphi 0, %s64
      %s82 = sphi 0, %s82
      %s84 = sphi 0, %s82
      %s85 = sphi 0, %s84
      %s99 = sphi 0, %s85
      %s103 = sphi 0, %s103
      %s105 = sphi 0, %s103
      %s106 = sphi 0, %s105
      %s120 = sphi 0, %s106
      %s128 = sphi 0, %s130
      %s131 = sphi 0, %s128
      %s132 = sphi 0, %s131
      %s148 = sphi 0, %s132
    $region4: #{tpu_custom_call.1} parent=1 // loop_header_branch
      %16 = sbr.rel (%p14) target = $region8
    $region5: #{tpu_custom_call.1} parent=1 // loop_body
      %s18 = ssub.s32 %s13, 1
      %s19 = ssub.s32 %s13, 2
      %s26 = sadd.s32 1, %s21
      %p27 = scmp.ge.s32.totalorder %s26, 1
      %s28 = scalar_select %p27, 0, %s26
      %s29 = sadd.s32 1, %s20
      %s30 = scalar_select %p27, %s29, %s20
      %p31 = scmp.ge.s32.totalorder %s30, 2
      %s32 = scalar_select %p31, 0, %s30
      %s33 = ssub.s32 %s20, %s32
      %s34 = ssub.s32 %s21, %s28
      %s35 = sor.u32 %s33, %s34
      %p36 = scmp.eq.s32.totalorder %s35, 0
      %s38 = sadd.s32 %s37, 1
      %s39 = scalar_select %p36, %s37, %s38
      %p42 = pneg %p36
      %p43 = scmp.eq.s32.totalorder %s13, 1
      %p44 = por %p42, %p43
      %p45 = scmp.ne.s32.totalorder %s37, %s40
      %p46 = scmp.eq.s32.totalorder %s13, 0
      %p47 = por %p45, %p46
      %p48 = scmp.ne.s32.totalorder %s37, %s40
      %p49 = scmp.eq.s32.totalorder %s18, 1
      %p50 = por %p48, %p49
      %p51 = scmp.ne.s32.totalorder %s40, %s41
      %p52 = scmp.eq.s32.totalorder %s18, 0
      %p53 = por %p51, %p52
      %p54 = scmp.ne.s32.totalorder %s40, %s41
      %p55 = scmp.eq.s32.totalorder %s19, 1
      %p56 = por %p54, %p55
      %p58 = scmp.ne.s32.totalorder %s41, %s57
      %p59 = scmp.eq.s32.totalorder %s19, 0
      %p60 = por %p58, %p59
      %s62 = sadd.s32 %s61, 1
      %p65 = scmp.eq.s32.totalorder %s13, 1
      %p66 = scmp.ne.s32.totalorder %s61, %s63
      %p67 = scmp.eq.s32.totalorder %s13, 0
      %p68 = por %p66, %p67
      %p69 = scmp.ne.s32.totalorder %s61, %s63
      %p70 = scmp.eq.s32.totalorder %s18, 1
      %p71 = por %p69, %p70
      %p72 = scmp.ne.s32.totalorder %s63, %s64
      %p73 = scmp.eq.s32.totalorder %s18, 0
      %p74 = por %p72, %p73
      %p75 = scmp.ne.s32.totalorder %s63, %s64
      %p76 = scmp.eq.s32.totalorder %s19, 1
      %p77 = por %p75, %p76
      %p79 = scmp.ne.s32.totalorder %s64, %s78
      %p80 = scmp.eq.s32.totalorder %s19, 0
      %p81 = por %p79, %p80
      %s83 = sadd.s32 %s82, 1
      %p86 = scmp.eq.s32.totalorder %s13, 1
      %p87 = scmp.ne.s32.totalorder %s82, %s84
      %p88 = scmp.eq.s32.totalorder %s13, 0
      %p89 = por %p87, %p88
      %p90 = scmp.ne.s32.totalorder %s82, %s84
      %p91 = scmp.eq.s32.totalorder %s18, 1
      %p92 = por %p90, %p91
      %p93 = scmp.ne.s32.totalorder %s84, %s85
      %p94 = scmp.eq.s32.totalorder %s18, 0
      %p95 = por %p93, %p94
      %p96 = scmp.ne.s32.totalorder %s84, %s85
      %p97 = scmp.eq.s32.totalorder %s19, 1
      %p98 = por %p96, %p97
      %p100 = scmp.ne.s32.totalorder %s85, %s99
      %p101 = scmp.eq.s32.totalorder %s19, 0
      %p102 = por %p100, %p101
      %s104 = sadd.s32 %s103, 1
      %p107 = scmp.eq.s32.totalorder %s13, 1
      %p108 = scmp.ne.s32.totalorder %s103, %s105
      %p109 = scmp.eq.s32.totalorder %s13, 0
      %p110 = por %p108, %p109
      %p111 = scmp.ne.s32.totalorder %s103, %s105
      %p112 = scmp.eq.s32.totalorder %s18, 1
      %p113 = por %p111, %p112
      %p114 = scmp.ne.s32.totalorder %s105, %s106
      %p115 = scmp.eq.s32.totalorder %s18, 0
      %p116 = por %p114, %p115
      %p117 = scmp.ne.s32.totalorder %s105, %s106
      %p118 = scmp.eq.s32.totalorder %s19, 1
      %p119 = por %p117, %p118
      %p121 = scmp.ne.s32.totalorder %s106, %s120
      %p122 = scmp.eq.s32.totalorder %s19, 0
      %p123 = por %p121, %p122
      %s124 = ssub.s32 %s20, %s32
      %s125 = ssub.s32 %s21, %s28
      %s126 = sor.u32 %s124, %s125
      %p127 = scmp.eq.s32.totalorder %s126, 0
      %s129 = sadd.s32 %s128, 1
      %s130 = scalar_select %p127, %s128, %s129
      %p133 = pneg %p127
      %p134 = scmp.eq.s32.totalorder %s13, 1
      %p135 = por %p133, %p134
      %p136 = scmp.ne.s32.totalorder %s128, %s131
      %p137 = scmp.eq.s32.totalorder %s13, 0
      %p138 = por %p136, %p137
      %p139 = scmp.ne.s32.totalorder %s128, %s131
      %p140 = scmp.eq.s32.totalorder %s18, 1
      %p141 = por %p139, %p140
      %p142 = scmp.ne.s32.totalorder %s131, %s132
      %p143 = scmp.eq.s32.totalorder %s18, 0
      %p144 = por %p142, %p143
      %p145 = scmp.ne.s32.totalorder %s131, %s132
      %p146 = scmp.eq.s32.totalorder %s19, 1
      %p147 = por %p145, %p146
      %p149 = scmp.ne.s32.totalorder %s132, %s148
      %p150 = scmp.eq.s32.totalorder %s19, 0
      %p151 = por %p149, %p150
      %p152 = scmp.le.s32.totalorder 1, %s13
      %p153 = scmp.lt.s32.totalorder %s13, 3
      %p154 = pnand %p152, %p153
      %p155 = pneg %p154
      // Predicated region
      $region9: #{tpu_custom_call.1} parent=5 // pred_check
        _
      $region10: #{tpu_custom_call.1} parent=5 // pred_check_branch
        %157 = sbr.rel (%p154) target = $region12
      $region11: #{tpu_custom_call.1} parent=5 // pred_region
        %s158 = ssub.s32 %s13, 1
        // Predicated region
        $region13: #{tpu_custom_call.1} parent=11 // pred_check
          %p159 = pneg %p74
        $region14: #{tpu_custom_call.1} parent=11 // pred_check_branch
          %161 = sbr.rel (%p159) target = $region16
        $region15: #{tpu_custom_call.1} parent=11 // pred_region
          _
        $region16: #{tpu_custom_call.1} parent=11 // pred_fallthru
          _
        // Predicated region
        $region17: #{tpu_custom_call.1} parent=11 // pred_check
          %p162 = pneg %p95
        $region18: #{tpu_custom_call.1} parent=11 // pred_check_branch
          %164 = sbr.rel (%p162) target = $region20
        $region19: #{tpu_custom_call.1} parent=11 // pred_region
          _
        $region20: #{tpu_custom_call.1} parent=11 // pred_fallthru
          _
        // Predicated region
        $region21: #{tpu_custom_call.1} parent=11 // pred_check
          %p165 = pneg %p116
        $region22: #{tpu_custom_call.1} parent=11 // pred_check_branch
          %167 = sbr.rel (%p165) target = $region24
        $region23: #{tpu_custom_call.1} parent=11 // pred_region
          _
        $region24: #{tpu_custom_call.1} parent=11 // pred_fallthru
          _
      $region12: #{tpu_custom_call.1} parent=5 // pred_fallthru
        _
      %p168 = scmp.lt.s32.totalorder %s13, 2
      // Predicated region
      $region25: #{tpu_custom_call.1} parent=5 // pred_check
        %p169 = pneg %p168
      $region26: #{tpu_custom_call.1} parent=5 // pred_check_branch
        %171 = sbr.rel (%p169) target = $region28
      $region27: #{tpu_custom_call.1} parent=5 // pred_region
        // Predicated region
        $region29: #{tpu_custom_call.1} parent=27 // pred_check
          %p172 = pneg %p47
        $region30: #{tpu_custom_call.1} parent=27 // pred_check_branch
          %174 = sbr.rel (%p172) target = $region32
        $region31: #{tpu_custom_call.1} parent=27 // pred_region
          %s175 = sand.u32 %s37, 1
          %s176 = scalar_lea.sflag [#allocation3], %s175
          %s177 = sand.u32 %s37, 1
          %s178 = smul.addr %s177, 64
          %s179 = scalar_lea.vmem [#allocation2], %s178
          %s180 = smul.u32 2, %s21
          %182 = vsyncadd %s176, 0
          %s183 = smul.addr %s20, 8
          %s184 = sadd.s32 %s180, %s183
          %s185 = smul.addr %s184, 8
          %s186 = scalar_lea.hbm %s0, %s185
          %s187 = sshll.u32 %s186, 4
          %s188 = int_to_ptr.hbm [resolvable:$true] %s187
          %s189 = sshll.u32 %s179, 4
          %s190 = int_to_ptr.vmem [resolvable:$true] %s189
          %195 = dma.hbm_to_vmem [thread:$0]  %s188, 1024, %s190, %s176, 128, 128, 8
        $region32: #{tpu_custom_call.1} parent=27 // pred_fallthru
          _
      $region28: #{tpu_custom_call.1} parent=5 // pred_fallthru
        _
      %p196 = scmp.le.s32.totalorder 1, %s13
      %p197 = scmp.lt.s32.totalorder %s13, 3
      %p198 = pnand %p196, %p197
      %p199 = pneg %p198
      // Predicated region
      $region33: #{tpu_custom_call.1} parent=5 // pred_check
        _
      $region34: #{tpu_custom_call.1} parent=5 // pred_check_branch
        %201 = sbr.rel (%p198) target = $region36
      $region35: #{tpu_custom_call.1} parent=5 // pred_region
        %s202 = ssub.s32 %s13, 1
        %s203 = sand.u32 %s40, 1
        %s204 = scalar_lea.sflag [#allocation3], %s203
        %s205 = sand.u32 %s40, 1
        %s206 = smul.addr %s205, 64
        %s207 = scalar_lea.vmem [#allocation2], %s206
        // Predicated region
        $region37: #{tpu_custom_call.1} parent=35 // pred_check
          %p208 = pneg %p53
        $region38: #{tpu_custom_call.1} parent=35 // pred_check_branch
          %210 = sbr.rel (%p208) target = $region40
        $region39: #{tpu_custom_call.1} parent=35 // pred_region
          %212 = dma.done %s204, 1024
        $region40: #{tpu_custom_call.1} parent=35 // pred_fallthru
          _
        %s213 = sand.u32 %s40, 1
        %s214 = scalar_lea.sflag [#allocation3], %s213
        %s215 = sand.u32 %s40, 1
        %s216 = smul.addr %s215, 64
        %s217 = scalar_lea.vmem [#allocation2], %s216
        %p218 = pneg %p53
        %p219 = pneg %p50
        %p220 = pneg %p74
        %p221 = pneg %p71
        %p222 = pneg %p95
        %p223 = pneg %p92
        %p224 = pneg %p116
        %p225 = pneg %p113
        %p226 = pneg %p144
        %p227 = pneg %p141
        %s228 = smul.u32 2, %s23
        %p229 = scmp.lt.s32.totalorder %s22, 1
        %s230 = scalar_select %p229, %s22, 1
        %p231 = scmp.lt.s32.totalorder %s228, 1
        %s232 = scalar_select %p231, %s228, 1
        %s233 = smul.addr %s230, 4
        %s234 = sadd.s32 %s232, %s233
        %s235 = smul.addr %s234, 8
        %s236 = scalar_lea.vmem %s4, %s235
        %s237 = smul.u32 2, %s23
        %s238 = smul.u32 2, %s23
        %p239 = scmp.lt.s32.totalorder %s22, 1
        %s240 = scalar_select %p239, %s22, 1
        %p241 = scmp.lt.s32.totalorder %s238, 1
        %s242 = scalar_select %p241, %s238, 1
        %s243 = smul.addr %s240, 4
        %s244 = sadd.s32 %s242, %s243
        %s245 = smul.addr %s244, 8
        %s246 = scalar_lea.vmem %s4, %s245
        %s247 = smul.u32 2, %s23
        %v248 = vld [vmem:[%s207] sm:$0xff]
        %v249 = vld [vmem:[%s207 + $0x8] sm:$0xff]
        %v250 = vld [vmem:[%s207 + $0x10] sm:$0xff]
        %v251 = vld [vmem:[%s207 + $0x18] sm:$0xff]
        %v252 = vld [vmem:[%s207 + $0x20] sm:$0xff]
        %v253 = vld [vmem:[%s207 + $0x28] sm:$0xff]
        %v254 = vld [vmem:[%s207 + $0x30] sm:$0xff]
        %v255 = vld [vmem:[%s207 + $0x38] sm:$0xff]
        %v256 = vld [vmem:[%s1] sm:$0x3]
        %v257 = vrot.slane %v252, 4
        %vm258 = vcmask 1047556
        %v259 = vsel %vm258, %v257, %v248
        %v260 = vrot.slane %v248, 4
        %v261 = vsel %vm258, %v252, %v260
        %v263 = vunpack.c.l.s4 1983009808
        %v264 = vunpack.c.0.s8 %v263
        %v265 = vperm.slane %v259, %v264
        %v267 = vunpack.c.l.s4 1983009808
        %v268 = vunpack.c.0.s8 %v267
        %v269 = vperm.slane %v261, %v268
        %v270 = vrot.slane %v254, 4
        %v271 = vsel %vm258, %v270, %v250
        %v272 = vrot.slane %v250, 4
        %v273 = vsel %vm258, %v254, %v272
        %v275 = vunpack.c.l.s4 1983009808
        %v276 = vunpack.c.0.s8 %v275
        %v277 = vperm.slane %v271, %v276
        %v279 = vunpack.c.l.s4 1983009808
        %v280 = vunpack.c.0.s8 %v279
        %v281 = vperm.slane %v273, %v280
        %v282 = vrot.slane %v277, 4
        %v283 = vsel %vm258, %v282, %v265
        %v284 = vrot.slane %v265, 4
        %v285 = vsel %vm258, %v277, %v284
        %v287 = vunpack.c.l.s4 1934713408
        %v288 = vunpack.c.0.s8 %v287
        %v289 = vperm.slane %v283, %v288
        %v291 = vunpack.c.l.s4 1934713408
        %v292 = vunpack.c.0.s8 %v291
        %v293 = vperm.slane %v285, %v292
        %v294 = vrot.slane %v281, 4
        %v295 = vsel %vm258, %v294, %v269
        %v296 = vrot.slane %v269, 4
        %v297 = vsel %vm258, %v281, %v296
        %v299 = vunpack.c.l.s4 1934713408
        %v300 = vunpack.c.0.s8 %v299
        %v301 = vperm.slane %v295, %v300
        %v303 = vunpack.c.l.s4 1934713408
        %v304 = vunpack.c.0.s8 %v303
        %v305 = vperm.slane %v297, %v304
        %v306 = vrot.slane %v289, 4
        %v307 = vsel %vm258, 0.0, %v306
        %v308 = vrot.slane %v293, 4
        %v309 = vsel %vm258, 0.0, %v308
        %v310 = vrot.slane %v301, 4
        %v311 = vsel %vm258, 0.0, %v310
        %v312 = vrot.slane %v305, 4
        %v313 = vsel %vm258, 0.0, %v312
        %v314 = vrot.slane %v253, 4
        %v315 = vsel %vm258, %v314, %v249
        %v316 = vrot.slane %v249, 4
        %v317 = vsel %vm258, %v253, %v316
        %v319 = vunpack.c.l.s4 1983009808
        %v320 = vunpack.c.0.s8 %v319
        %v321 = vperm.slane %v315, %v320
        %v323 = vunpack.c.l.s4 1983009808
        %v324 = vunpack.c.0.s8 %v323
        %v325 = vperm.slane %v317, %v324
        %v326 = vrot.slane %v255, 4
        %v327 = vsel %vm258, %v326, %v251
        %v328 = vrot.slane %v251, 4
        %v329 = vsel %vm258, %v255, %v328
        %v331 = vunpack.c.l.s4 1983009808
        %v332 = vunpack.c.0.s8 %v331
        %v333 = vperm.slane %v327, %v332
        %v335 = vunpack.c.l.s4 1983009808
        %v336 = vunpack.c.0.s8 %v335
        %v337 = vperm.slane %v329, %v336
        %v338 = vrot.slane %v333, 4
        %v339 = vsel %vm258, %v338, %v321
        %v340 = vrot.slane %v321, 4
        %v341 = vsel %vm258, %v333, %v340
        %v343 = vunpack.c.l.s4 1934713408
        %v344 = vunpack.c.0.s8 %v343
        %v345 = vperm.slane %v339, %v344
        %v347 = vunpack.c.l.s4 1934713408
        %v348 = vunpack.c.0.s8 %v347
        %v349 = vperm.slane %v341, %v348
        %v350 = vrot.slane %v337, 4
        %v351 = vsel %vm258, %v350, %v325
        %v352 = vrot.slane %v325, 4
        %v353 = vsel %vm258, %v337, %v352
        %v355 = vunpack.c.l.s4 1934713408
        %v356 = vunpack.c.0.s8 %v355
        %v357 = vperm.slane %v351, %v356
        %v359 = vunpack.c.l.s4 1934713408
        %v360 = vunpack.c.0.s8 %v359
        %v361 = vperm.slane %v353, %v360
        %v362 = vrot.slane %v345, 4
        %v363 = vsel %vm258, 0.0, %v362
        %v364 = vrot.slane %v349, 4
        %v365 = vsel %vm258, 0.0, %v364
        %v366 = vrot.slane %v357, 4
        %v367 = vsel %vm258, 0.0, %v366
        %v368 = vrot.slane %v361, 4
        %v369 = vsel %vm258, 0.0, %v368
        %371 = vrot.lane.b32.xlu0 %v307, 16
        %v372 = vpop.permute.xlu0 %371
        %375 = vrot.lane.b32.xlu0 %v293, 32
        %v376 = vpop.permute.xlu0 %375
        %379 = vrot.lane.b32.xlu0 %v309, 48
        %v380 = vpop.permute.xlu0 %379
        %383 = vrot.lane.b32.xlu0 %v301, 64
        %v384 = vpop.permute.xlu0 %383
        %387 = vrot.lane.b32.xlu0 %v311, 80
        %v388 = vpop.permute.xlu0 %387
        %391 = vrot.lane.b32.xlu0 %v305, 96
        %v392 = vpop.permute.xlu0 %391
        %395 = vrot.lane.b32.xlu0 %v313, 112
        %v396 = vpop.permute.xlu0 %395
        %399 = vrot.lane.b32.xlu0 %v363, 16
        %v400 = vpop.permute.xlu0 %399
        %403 = vrot.lane.b32.xlu0 %v349, 32
        %v404 = vpop.permute.xlu0 %403
        %407 = vrot.lane.b32.xlu0 %v365, 48
        %v408 = vpop.permute.xlu0 %407
        %411 = vrot.lane.b32.xlu0 %v357, 64
        %v412 = vpop.permute.xlu0 %411
        %415 = vrot.lane.b32.xlu0 %v367, 80
        %v416 = vpop.permute.xlu0 %415
        %419 = vrot.lane.b32.xlu0 %v361, 96
        %v420 = vpop.permute.xlu0 %419
        %423 = vrot.lane.b32.xlu0 %v369, 112
        %v424 = vpop.permute.xlu0 %423
        %vm426 = vcmask 130048
        %v427 = vsel %vm426, %v289, %v372
        %vm428 = vcmask 261120
        %v429 = vsel %vm428, %v427, %v376
        %vm430 = vcmask 392192
        %v431 = vsel %vm430, %v429, %v380
        %vm432 = vcmask 523264
        %v433 = vsel %vm432, %v431, %v384
        %vm434 = vcmask 654336
        %v435 = vsel %vm434, %v433, %v388
        %vm436 = vcmask 785408
        %v437 = vsel %vm436, %v435, %v392
        %vm438 = vcmask 916480
        %v439 = vsel %vm438, %v437, %v396
        %v440 = vsel %vm426, %v345, %v400
        %v441 = vsel %vm428, %v440, %v404
        %v442 = vsel %vm430, %v441, %v408
        %v443 = vsel %vm432, %v442, %v412
        %v444 = vsel %vm434, %v443, %v416
        %v445 = vsel %vm436, %v444, %v420
        %v446 = vsel %vm438, %v445, %v424
        %v447 = vld [vmem:[%s2] sm:$0x3]
        %449 = vset.pattern.permute.xlu0 0
        %450 = vperm.xlu0 %449, %v447
        %v451 = vpop.permute.xlu0 %450
        %vm453 = vcmask 31744
        %v455 = vsel %vm453, %v256, 0
        %vm457 = vcmask 1043456
        %v459 = vsel %vm457, %v439, 0
        %v462 = vsel %vm457, %v446, 0
        %464 = vmatpush.msra.mxu0 0.0
        %465 = vmatpush.msra.mxu0 0.0
        %466 = vmatpush.msra.mxu0 0.0
        %467 = vmatpush.msra.mxu0 0.0
        %468 = vmatpush.msra.mxu0 0.0
        %469 = vmatpush.msra.mxu0 0.0
        %470 = vmatpush.msra.mxu0 0.0
        %471 = vmatpush.msra.mxu0 0.0
        %472 = vmatpush.msra.mxu0 0.0
        %473 = vmatpush.msra.mxu0 0.0
        %474 = vmatpush.msra.mxu0 0.0
        %475 = vmatpush.msra.mxu0 0.0
        %476 = vmatpush.msra.mxu0 0.0
        %477 = vmatpush.msra.mxu0 0.0
        %478 = vmatpush.msra.mxu0 0.0
        %479 = vmatpush.msra.mxu0 %v459
        %480 = vmatmul.f32.gmra.mxu0 %v455
        %v481 = vpop.f32.mrf.mxu0
        %v482 = vadd.f32 %v451, %v481
        %483 = vdwg.mxu0
        %484 = vmatpush.msra.mxu0 0.0
        %485 = vmatpush.msra.mxu0 0.0
        %486 = vmatpush.msra.mxu0 0.0
        %487 = vmatpush.msra.mxu0 0.0
        %488 = vmatpush.msra.mxu0 0.0
        %489 = vmatpush.msra.mxu0 0.0
        %490 = vmatpush.msra.mxu0 0.0
        %491 = vmatpush.msra.mxu0 0.0
        %492 = vmatpush.msra.mxu0 0.0
        %493 = vmatpush.msra.mxu0 0.0
        %494 = vmatpush.msra.mxu0 0.0
        %495 = vmatpush.msra.mxu0 0.0
        %496 = vmatpush.msra.mxu0 0.0
        %497 = vmatpush.msra.mxu0 0.0
        %498 = vmatpush.msra.mxu0 0.0
        %499 = vmatpush.msra.mxu0 %v462
        %500 = vmatmul.f32.gmra.mxu0 %v455
        %v501 = vpop.f32.mrf.mxu0
        %v502 = vadd.f32 %v451, %v501
        %503 = vdwg.mxu0
        %505 = vrot.lane.b32.xlu0 %v482, 112
        %v506 = vpop.permute.xlu0 %505
        %508 = vrot.lane.b32.xlu0 %v482, 96
        %v509 = vpop.permute.xlu0 %508
        %511 = vrot.lane.b32.xlu0 %v482, 80
        %v512 = vpop.permute.xlu0 %511
        %514 = vrot.lane.b32.xlu0 %v482, 64
        %v515 = vpop.permute.xlu0 %514
        %517 = vrot.lane.b32.xlu0 %v482, 48
        %v518 = vpop.permute.xlu0 %517
        %520 = vrot.lane.b32.xlu0 %v482, 32
        %v521 = vpop.permute.xlu0 %520
        %523 = vrot.lane.b32.xlu0 %v482, 16
        %v524 = vpop.permute.xlu0 %523
        %527 = vrot.lane.b32.xlu0 %v502, 112
        %v528 = vpop.permute.xlu0 %527
        %530 = vrot.lane.b32.xlu0 %v502, 96
        %v531 = vpop.permute.xlu0 %530
        %533 = vrot.lane.b32.xlu0 %v502, 80
        %v534 = vpop.permute.xlu0 %533
        %536 = vrot.lane.b32.xlu0 %v502, 64
        %v537 = vpop.permute.xlu0 %536
        %539 = vrot.lane.b32.xlu0 %v502, 48
        %v540 = vpop.permute.xlu0 %539
        %542 = vrot.lane.b32.xlu0 %v502, 32
        %v543 = vpop.permute.xlu0 %542
        %545 = vrot.lane.b32.xlu0 %v502, 16
        %v546 = vpop.permute.xlu0 %545
        %v548 = vrot.slane %v509, 4
        %v549 = vsel %vm258, %v548, %v482
        %v551 = vunpack.c.l.s4 1983009808
        %v552 = vunpack.c.0.s8 %v551
        %v553 = vperm.slane %v549, %v552
        %v554 = vrot.slane %v512, 4
        %v555 = vsel %vm258, %v554, %v506
        %v557 = vunpack.c.l.s4 1983009808
        %v558 = vunpack.c.0.s8 %v557
        %v559 = vperm.slane %v555, %v558
        %v560 = vrot.slane %v521, 4
        %v561 = vsel %vm258, %v560, %v515
        %v563 = vunpack.c.l.s4 1983009808
        %v564 = vunpack.c.0.s8 %v563
        %v565 = vperm.slane %v561, %v564
        %v566 = vrot.slane %v524, 4
        %v567 = vsel %vm258, %v566, %v518
        %v569 = vunpack.c.l.s4 1983009808
        %v570 = vunpack.c.0.s8 %v569
        %v571 = vperm.slane %v567, %v570
        %v572 = vrot.slane %v559, 4
        %v573 = vsel %vm258, %v572, %v553
        %v575 = vunpack.c.l.s4 1934713408
        %v576 = vunpack.c.0.s8 %v575
        %v577 = vperm.slane %v573, %v576
        %v578 = vrot.slane %v571, 4
        %v579 = vsel %vm258, %v578, %v565
        %v581 = vunpack.c.l.s4 1934713408
        %v582 = vunpack.c.0.s8 %v581
        %v583 = vperm.slane %v579, %v582
        %v584 = vrot.slane %v583, 4
        %v585 = vsel %vm258, %v584, %v577
        %v586 = vrot.slane %v577, 4
        %v587 = vsel %vm258, %v583, %v586
        %v588 = vrot.slane %v531, 4
        %v589 = vsel %vm258, %v588, %v502
        %v591 = vunpack.c.l.s4 1983009808
        %v592 = vunpack.c.0.s8 %v591
        %v593 = vperm.slane %v589, %v592
        %v594 = vrot.slane %v534, 4
        %v595 = vsel %vm258, %v594, %v528
        %v597 = vunpack.c.l.s4 1983009808
        %v598 = vunpack.c.0.s8 %v597
        %v599 = vperm.slane %v595, %v598
        %v600 = vrot.slane %v543, 4
        %v601 = vsel %vm258, %v600, %v537
        %v603 = vunpack.c.l.s4 1983009808
        %v604 = vunpack.c.0.s8 %v603
        %v605 = vperm.slane %v601, %v604
        %v606 = vrot.slane %v546, 4
        %v607 = vsel %vm258, %v606, %v540
        %v609 = vunpack.c.l.s4 1983009808
        %v610 = vunpack.c.0.s8 %v609
        %v611 = vperm.slane %v607, %v610
        %v612 = vrot.slane %v599, 4
        %v613 = vsel %vm258, %v612, %v593
        %v615 = vunpack.c.l.s4 1934713408
        %v616 = vunpack.c.0.s8 %v615
        %v617 = vperm.slane %v613, %v616
        %v618 = vrot.slane %v611, 4
        %v619 = vsel %vm258, %v618, %v605
        %v621 = vunpack.c.l.s4 1934713408
        %v622 = vunpack.c.0.s8 %v621
        %v623 = vperm.slane %v619, %v622
        %v624 = vrot.slane %v623, 4
        %v625 = vsel %vm258, %v624, %v617
        %v626 = vrot.slane %v617, 4
        %v627 = vsel %vm258, %v623, %v626
        %v628 = vld [vmem:[%s3] sm:$0xff]
        %v629 = vld [vmem:[%s3 + $0x8] sm:$0xff]
        %v631 = vsel %vm426, %v585, 0
        %v634 = vsel %vm426, %v625, 0
        %636 = vmatpush.msra.mxu0 0.0
        %637 = vmatpush.msra.mxu0 0.0
        %638 = vmatpush.msra.mxu0 0.0
        %639 = vmatpush.msra.mxu0 0.0
        %640 = vmatpush.msra.mxu0 0.0
        %641 = vmatpush.msra.mxu0 0.0
        %642 = vmatpush.msra.mxu0 0.0
        %643 = vmatpush.msra.mxu0 0.0
        %644 = vmatpush.msra.mxu0 0.0
        %645 = vmatpush.msra.mxu0 0.0
        %646 = vmatpush.msra.mxu0 0.0
        %647 = vmatpush.msra.mxu0 0.0
        %648 = vmatpush.msra.mxu0 0.0
        %649 = vmatpush.msra.mxu0 0.0
        %650 = vmatpush.msra.mxu0 %v629
        %651 = vmatpush.msra.mxu0 %v628
        %652 = vmatmul.f32.gmra.mxu0 %v631
        %v653 = vpop.f32.mrf.mxu0
        %v654 = vadd.f32 0.0, %v653
        %655 = vmatmul.f32.gmra.mxu0 %v634
        %v656 = vpop.f32.mrf.mxu0
        %v657 = vadd.f32 0.0, %v656
        %658 = vdwg.mxu0
        %659 = vst.msk [vmem:[%s246] sm:$0xff] %vm453, %v654
        %660 = vst.msk [vmem:[%s246 + $0x8] sm:$0xff] %vm453, %v657
        %v661 = vld [vmem:[%s3] sm:$0xff]
        %v662 = vld [vmem:[%s3 + $0x8] sm:$0xff]
        %v664 = vsel %vm426, %v587, 0
        %v667 = vsel %vm426, %v627, 0
        %669 = vmatpush.msra.mxu0 0.0
        %670 = vmatpush.msra.mxu0 0.0
        %671 = vmatpush.msra.mxu0 0.0
        %672 = vmatpush.msra.mxu0 0.0
        %673 = vmatpush.msra.mxu0 0.0
        %674 = vmatpush.msra.mxu0 0.0
        %675 = vmatpush.msra.mxu0 0.0
        %676 = vmatpush.msra.mxu0 0.0
        %677 = vmatpush.msra.mxu0 0.0
        %678 = vmatpush.msra.mxu0 0.0
        %679 = vmatpush.msra.mxu0 0.0
        %680 = vmatpush.msra.mxu0 0.0
        %681 = vmatpush.msra.mxu0 0.0
        %682 = vmatpush.msra.mxu0 0.0
        %683 = vmatpush.msra.mxu0 %v662
        %684 = vmatpush.msra.mxu0 %v661
        %685 = vmatmul.f32.gmra.mxu0 %v664
        %v686 = vpop.f32.mrf.mxu0
        %v687 = vadd.f32 0.0, %v686
        %688 = vmatmul.f32.gmra.mxu0 %v667
        %v689 = vpop.f32.mrf.mxu0
        %v690 = vadd.f32 0.0, %v689
        %691 = vdwg.mxu0
        %s692 = scalar_lea.vmem %s246, 16
        %693 = vst.msk [vmem:[%s692] sm:$0xff] %vm453, %v687
        %694 = vst.msk [vmem:[%s692 + $0x8] sm:$0xff] %vm453, %v690
        %s695 = smul.u32 2, %s23
        %p696 = scmp.lt.s32.totalorder %s22, 1
        %s697 = scalar_select %p696, %s22, 1
        %p698 = scmp.lt.s32.totalorder %s695, 1
        %s699 = scalar_select %p698, %s695, 1
        %s700 = smul.addr %s697, 4
        %s701 = sadd.s32 %s699, %s700
        %s702 = smul.addr %s701, 8
        %s703 = scalar_lea.vmem %s4, %s702
        // Predicated region
        $region41: #{tpu_custom_call.1} parent=35 // pred_check
          %p704 = pneg %p141
        $region42: #{tpu_custom_call.1} parent=35 // pred_check_branch
          %706 = sbr.rel (%p704) target = $region44
        $region43: #{tpu_custom_call.1} parent=35 // pred_region
          %s707 = smul.u32 2, %s23
        $region44: #{tpu_custom_call.1} parent=35 // pred_fallthru
          _
      $region36: #{tpu_custom_call.1} parent=5 // pred_fallthru
        _
      %p708 = scmp.le.s32.totalorder 2, %s13
      // Predicated region
      $region45: #{tpu_custom_call.1} parent=5 // pred_check
        %p709 = pneg %p708
      $region46: #{tpu_custom_call.1} parent=5 // pred_check_branch
        %711 = sbr.rel (%p709) target = $region48
      $region47: #{tpu_custom_call.1} parent=5 // pred_region
        %s712 = ssub.s32 %s13, 2
        // Predicated region
        $region49: #{tpu_custom_call.1} parent=47 // pred_check
          %p713 = pneg %p147
        $region50: #{tpu_custom_call.1} parent=47 // pred_check_branch
          %715 = sbr.rel (%p713) target = $region52
        $region51: #{tpu_custom_call.1} parent=47 // pred_region
          %s716 = smul.u32 2, %s25
          %p717 = scmp.lt.s32.totalorder %s24, 1
          %s718 = scalar_select %p717, %s24, 1
          %p719 = scmp.lt.s32.totalorder %s716, 1
          %s720 = scalar_select %p719, %s716, 1
          %s721 = smul.addr %s718, 4
          %s722 = sadd.s32 %s720, %s721
          %s723 = smul.addr %s722, 8
          %s724 = scalar_lea.vmem %s4, %s723
        $region52: #{tpu_custom_call.1} parent=47 // pred_fallthru
          _
      $region48: #{tpu_custom_call.1} parent=5 // pred_fallthru
        _
    $region6: #{tpu_custom_call.1} parent=1 // loop_footer
      %s17 = sadd.s32 1, %s13
    $region7: #{tpu_custom_call.1} parent=1 // loop_footer_branch
      %12 = sbr.rel target = $region3
    $region8: #{tpu_custom_call.1} parent=1 // loop_exit
      _
    %725 = vsyncpa [#allocation3], 1
    %s726 = scalar_lea.sflag [#allocation3], 1
    %727 = vsyncpa %s726, 1

</llo_original>
